<compile_context>
chip_gen: v7x
topology: tpu7x:2x2x1
jax: 0.10.0
libtpu: 0.0.40
codegen_flags: <defaults>
</compile_context>

<pallas_src>
import jax
import jax.numpy as jnp
from jax import lax
from jax.experimental import pallas as pl
from jax.experimental.pallas import tpu as pltpu


def _round_up(x, m):
    return ((x + m - 1) // m) * m


# ---------------------------------------------------------------------------
# Kernel 1: hoisted feature transform  XW1 = X @ W1  (row-tiled, parallel)
# ---------------------------------------------------------------------------
def _feature_transform_kernel(x_ref, w_ref, o_ref):
    o_ref[...] = jnp.dot(
        x_ref[...], w_ref[...], preferred_element_type=jnp.float32
    ).astype(o_ref.dtype)


def feature_transform(x_p, w_p, *, tm):
    n_pad, f_pad = x_p.shape
    h_pad = w_p.shape[1]
    return pl.pallas_call(
        _feature_transform_kernel,
        out_shape=jax.ShapeDtypeStruct((n_pad, h_pad), jnp.bfloat16),
        grid=(n_pad // tm,),
        in_specs=[
            pl.BlockSpec((tm, f_pad), lambda i: (i, 0)),      # streamed X row tile
            pl.BlockSpec((f_pad, h_pad), lambda i: (0, 0)),   # resident W1
        ],
        out_specs=pl.BlockSpec((tm, h_pad), lambda i: (i, 0)),
        compiler_params=pltpu.CompilerParams(
            dimension_semantics=("parallel",)),               # megacore on v7x
    )(x_p, w_p)


# ---------------------------------------------------------------------------
# Kernel 2: fused 2-layer aggregation, A streamed from HBM exactly once
# ---------------------------------------------------------------------------
def _fused_gcn_kernel(a_ref, xw1_ref, b1_ref, w2_ref, b2_ref, o_ref):
    i = pl.program_id(0)

    @pl.when(i == 0)
    def _init():
        # Initialize the resident output accumulator with the layer-2 bias.
        o_ref[...] = jnp.broadcast_to(b2_ref[...], o_ref.shape)

    a_tile = a_ref[...]                                       # (TM, N_pad) bf16

    # Layer 1 for this row tile: h_i = relu(A_i @ XW1 + b1)   -> MXU + VPU
    h = jnp.dot(a_tile, xw1_ref[...], preferred_element_type=jnp.float32)
    h = jnp.maximum(h + b1_ref[...], 0.0)
    # (eval-mode dropout is the identity here)

    # Layer 2 feature transform for this tile of h.
    hw2 = jnp.dot(
        h.astype(jnp.bfloat16), w2_ref[...],
        preferred_element_type=jnp.float32,
    ).astype(jnp.bfloat16)

    # Layer 2 aggregation: out += A[:, tile_i] @ hw2.  A_norm is symmetric,
    # so A[:, tile_i] == A[tile_i, :]^T == a_tile^T  (A read from HBM once).
    o_ref[...] += lax.dot_general(
        a_tile, hw2,
        dimension_numbers=(((0,), (0,)), ((), ())),
        preferred_element_type=jnp.float32,
    )


def fused_two_layer_aggregate(a_p, xw1, b1_p, w2_p, b2_p, *, tm):
    n_pad = a_p.shape[0]
    h_pad = xw1.shape[1]
    c_pad = w2_p.shape[1]
    return pl.pallas_call(
        _fused_gcn_kernel,
        out_shape=jax.ShapeDtypeStruct((n_pad, c_pad), jnp.float32),
        grid=(n_pad // tm,),
        in_specs=[
            pl.BlockSpec((tm, n_pad), lambda i: (i, 0)),      # streamed A row tile
            pl.BlockSpec((n_pad, h_pad), lambda i: (0, 0)),   # resident XW1 (bf16)
            pl.BlockSpec((1, h_pad), lambda i: (0, 0)),       # resident b1
            pl.BlockSpec((h_pad, c_pad), lambda i: (0, 0)),   # resident W2 (bf16)
            pl.BlockSpec((1, c_pad), lambda i: (0, 0)),       # resident b2
        ],
        # Constant output block index -> VMEM-resident accumulator across grid.
        out_specs=pl.BlockSpec((n_pad, c_pad), lambda i: (0, 0)),
        compiler_params=pltpu.CompilerParams(
            dimension_semantics=("arbitrary",)),              # reduction axis
    )(a_p, xw1, b1_p, w2_p, b2_p)


# ---------------------------------------------------------------------------
# Full GCN forward (eval mode): pad + cast in the wrapper, run the two kernels.
# ---------------------------------------------------------------------------
def gcn_forward(x, a_norm, params, *, tm=256):
    """a_norm must be the symmetric normalized dense adjacency
    produced by build_normalized_adjacency() (built once per graph)."""
    n, f = x.shape
    h = params["w1"].shape[1]
    c = params["w2"].shape[1]

    tm = min(tm, _round_up(n, 128))          # tm is a multiple of 128
    n_pad = _round_up(n, tm)
    f_pad = _round_up(f, 128)
    h_pad = _round_up(h, 128)
    c_pad = _round_up(c, 128)

    # bf16 streamed operands (half the HBM traffic), f32 biases.
    a_p = jnp.pad(a_norm.astype(jnp.bfloat16), ((0, n_pad - n), (0, n_pad - n)))
    x_p = jnp.pad(x.astype(jnp.bfloat16), ((0, n_pad - n), (0, f_pad - f)))
    w1_p = jnp.pad(params["w1"].astype(jnp.bfloat16),
                   ((0, f_pad - f), (0, h_pad - h)))
    b1_p = jnp.pad(params["b1"], (0, h_pad - h)).reshape(1, h_pad)
    w2_p = jnp.pad(params["w2"].astype(jnp.bfloat16),
                   ((0, h_pad - h), (0, c_pad - c)))
    b2_p = jnp.pad(params["b2"], (0, c_pad - c)).reshape(1, c_pad)

    xw1 = feature_transform(x_p, w1_p, tm=tm)                     # (N_pad, H_pad)
    out_p = fused_two_layer_aggregate(a_p, xw1, b1_p, w2_p, b2_p, tm=tm)
    return out_p[:n, :c]                                          # drop padding


# ---------------------------------------------------------------------------
# Plain-JAX glue: dense symmetric normalized adjacency (built once per graph)
# ---------------------------------------------------------------------------
def build_normalized_adjacency(edge_index, num_nodes):
    src, dst = edge_index[0], edge_index[1]
    a = jnp.zeros((num_nodes, num_nodes), jnp.float32)
    a = a.at[src, dst].set(1.0)
    a = jnp.maximum(a, a.T)                        # symmetrize (undirected graph)
    a = a + jnp.eye(num_nodes, dtype=jnp.float32)  # self-loops
    deg = jnp.sum(a, axis=1)
    d_inv_sqrt = jnp.where(deg > 0, 1.0 / jnp.sqrt(deg), 0.0)
    # Result is symmetric -- the fused kernel relies on this.
    return d_inv_sqrt[:, None] * a * d_inv_sqrt[None, :]


def init_params(key, num_features, hidden_channels, num_classes):
    k1, k2 = jax.random.split(key)

    def glorot(k, fan_in, fan_out):
        limit = jnp.sqrt(6.0 / (fan_in + fan_out))
        return jax.random.uniform(k, (fan_in, fan_out), jnp.float32, -limit, limit)

    return {
        "w1": glorot(k1, num_features, hidden_channels),
        "b1": jnp.zeros((hidden_channels,), jnp.float32),
        "w2": glorot(k2, hidden_channels, num_classes),
        "b2": jnp.zeros((num_classes,), jnp.float32),
    }


if __name__ == "__main__":
    # Small synthetic stand-in for the Cora Planetoid dataset.
    num_nodes = 32
    num_features = 16
    hidden_channels = 32
    num_classes = 8
    num_edges = 64

    key = jax.random.PRNGKey(0)
    k_x, k_e, k_p = jax.random.split(key, 3)

    x = jax.random.normal(k_x, (num_nodes, num_features), jnp.float32)
    edge_index = jax.random.randint(k_e, (2, num_edges), 0, num_nodes, jnp.int32)
    params = init_params(k_p, num_features, hidden_channels, num_classes)

    # Adjacency built once per graph (hoisted out of the per-call forward).
    a_norm = build_normalized_adjacency(edge_index, num_nodes)

    out = jax.jit(gcn_forward)(x, a_norm, params)
    jax.block_until_ready(out)
    assert out.shape == (num_nodes, num_classes)

    # Reference mirroring the kernel's dtype flow (bf16 MXU operands, f32 accum).
    a_bf = a_norm.astype(jnp.bfloat16)
    xw1_ref = jnp.dot(x.astype(jnp.bfloat16), params["w1"].astype(jnp.bfloat16),
                      preferred_element_type=jnp.float32).astype(jnp.bfloat16)
    h_ref = jnp.maximum(
        jnp.dot(a_bf, xw1_ref, preferred_element_type=jnp.float32) + params["b1"], 0.0)
    hw2_ref = jnp.dot(h_ref.astype(jnp.bfloat16), params["w2"].astype(jnp.bfloat16),
                      preferred_element_type=jnp.float32).astype(jnp.bfloat16)
    ref = jnp.dot(a_bf, hw2_ref, preferred_element_type=jnp.float32) + params["b2"]
    assert jnp.allclose(out, ref, atol=2e-3, rtol=2e-3), \
        float(jnp.max(jnp.abs(out - ref)))

    print("KERNEL_OK")
</pallas_src>

<mosaic_0001>
module attributes {stable_mosaic.version = 11 : i64} {
  func.func @_feature_transform_kernel(%arg0: i32, %arg1: memref<128x128xbf16, #tpu.memory_space<vmem>>, %arg2: memref<128x128xbf16, #tpu.memory_space<vmem>>, %arg3: memref<128x128xbf16, #tpu.memory_space<vmem>>) attributes {dimension_semantics = [#tpu.dimension_semantics<parallel>], iteration_bounds = array<i64: 1>, scalar_prefetch = 0 : i64, scratch_operands = 0 : i64, tpu.core_type = #tpu.core_type<tc>, window_params = [{transform_indices = @transform_0, window_bounds = array<i64: 128, 128>}, {pipeline_mode = #tpu.pipeline_mode<synchronous>, transform_indices = @transform_1, window_bounds = array<i64: 128, 128>}, {transform_indices = @transform_2, window_bounds = array<i64: 128, 128>}]} {
    %c0 = arith.constant 0 : index
    %c0_0 = arith.constant 0 : index
    %0 = vector.load %arg1[%c0, %c0_0] : memref<128x128xbf16, #tpu.memory_space<vmem>>, vector<128x128xbf16>
    %c0_1 = arith.constant 0 : index
    %c0_2 = arith.constant 0 : index
    %1 = vector.load %arg2[%c0_1, %c0_2] : memref<128x128xbf16, #tpu.memory_space<vmem>>, vector<128x128xbf16>
    %cst = arith.constant dense<0.000000e+00> : vector<128x128xf32>
    %2 = tpu.matmul %0, %1, %cst {dimension_numbers = #tpu.dot_dimension_numbers<[1], [0], [0], [1], [0, 0, 1, 1], [], []>} : vector<128x128xbf16>, vector<128x128xbf16>, vector<128x128xf32> -> vector<128x128xf32>
    %3 = arith.truncf %2 : vector<128x128xf32> to vector<128x128xbf16>
    %c0_3 = arith.constant 0 : index
    %c0_4 = arith.constant 0 : index
    %4 = vector.load %arg3[%c0_3, %c0_4] : memref<128x128xbf16, #tpu.memory_space<vmem>>, vector<128x128xbf16>
    tpu.vector_store %arg3[%c0_3, %c0_4], %3 {strides = array<i32>} : memref<128x128xbf16, #tpu.memory_space<vmem>>, vector<128x128xbf16>,
    return
  }
  func.func @transform_0(%arg0: i32) -> (i32, i32) {
    %c0_i32 = arith.constant 0 : i32
    %c0_i32_0 = arith.constant 0 : i32
    return %arg0, %c0_i32 : i32, i32
  }
  func.func @transform_1(%arg0: i32) -> (i32, i32) {
    %c0_i32 = arith.constant 0 : i32
    %c0_i32_0 = arith.constant 0 : i32
    %c0_i32_1 = arith.constant 0 : i32
    return %c0_i32, %c0_i32_0 : i32, i32
  }
  func.func @transform_2(%arg0: i32) -> (i32, i32) {
    %c0_i32 = arith.constant 0 : i32
    %c0_i32_0 = arith.constant 0 : i32
    return %arg0, %c0_i32 : i32, i32
  }
}

module attributes {stable_mosaic.version = 11 : i64} {
  func.func @_fused_gcn_kernel(%arg0: i32, %arg1: memref<128x128xbf16, #tpu.memory_space<vmem>>, %arg2: memref<128x128xbf16, #tpu.memory_space<vmem>>, %arg3: memref<1x128xf32, #tpu.memory_space<vmem>>, %arg4: memref<128x128xbf16, #tpu.memory_space<vmem>>, %arg5: memref<1x128xf32, #tpu.memory_space<vmem>>, %arg6: memref<128x128xf32, #tpu.memory_space<vmem>>) attributes {dimension_semantics = [#tpu.dimension_semantics<arbitrary>], iteration_bounds = array<i64: 1>, scalar_prefetch = 0 : i64, scratch_operands = 0 : i64, tpu.core_type = #tpu.core_type<tc>, window_params = [{transform_indices = @transform_0, window_bounds = array<i64: 128, 128>}, {pipeline_mode = #tpu.pipeline_mode<synchronous>, transform_indices = @transform_1, window_bounds = array<i64: 128, 128>}, {pipeline_mode = #tpu.pipeline_mode<synchronous>, transform_indices = @transform_2, window_bounds = array<i64: 1, 128>}, {pipeline_mode = #tpu.pipeline_mode<synchronous>, transform_indices = @transform_3, window_bounds = array<i64: 128, 128>}, {pipeline_mode = #tpu.pipeline_mode<synchronous>, transform_indices = @transform_4, window_bounds = array<i64: 1, 128>}, {pipeline_mode = #tpu.pipeline_mode<synchronous>, transform_indices = @transform_5, window_bounds = array<i64: 128, 128>}]} {
    %c0_i32 = arith.constant 0 : i32
    %0 = arith.cmpi eq, %arg0, %c0_i32 : i32
    %1 = arith.extui %0 : i1 to i32
    %c0_i32_0 = arith.constant 0 : i32
    %2 = arith.cmpi ne, %1, %c0_i32_0 : i32
    scf.if %2 {
      %c0_15 = arith.constant 0 : index
      %c0_16 = arith.constant 0 : index
      %19 = vector.load %arg5[%c0_15, %c0_16] : memref<1x128xf32, #tpu.memory_space<vmem>>, vector<1x128xf32>
      %20 = vector.shape_cast %19 : vector<1x128xf32> to vector<1x128xf32>
      %21 = vector.broadcast %20 : vector<1x128xf32> to vector<128x128xf32>
      %c0_17 = arith.constant 0 : index
      %c0_18 = arith.constant 0 : index
      %22 = vector.load %arg6[%c0_17, %c0_18] : memref<128x128xf32, #tpu.memory_space<vmem>>, vector<128x128xf32>
      tpu.vector_store %arg6[%c0_17, %c0_18], %21 {strides = array<i32>} : memref<128x128xf32, #tpu.memory_space<vmem>>, vector<128x128xf32>,
    } else {
    }
    %c0 = arith.constant 0 : index
    %c0_1 = arith.constant 0 : index
    %3 = vector.load %arg1[%c0, %c0_1] : memref<128x128xbf16, #tpu.memory_space<vmem>>, vector<128x128xbf16>
    %c0_2 = arith.constant 0 : index
    %c0_3 = arith.constant 0 : index
    %4 = vector.load %arg2[%c0_2, %c0_3] : memref<128x128xbf16, #tpu.memory_space<vmem>>, vector<128x128xbf16>
    %cst = arith.constant dense<0.000000e+00> : vector<128x128xf32>
    %5 = tpu.matmul %3, %4, %cst {dimension_numbers = #tpu.dot_dimension_numbers<[1], [0], [0], [1], [0, 0, 1, 1], [], []>} : vector<128x128xbf16>, vector<128x128xbf16>, vector<128x128xf32> -> vector<128x128xf32>
    %c0_4 = arith.constant 0 : index
    %c0_5 = arith.constant 0 : index
    %6 = vector.load %arg3[%c0_4, %c0_5] : memref<1x128xf32, #tpu.memory_space<vmem>>, vector<1x128xf32>
    %7 = vector.broadcast %6 : vector<1x128xf32> to vector<128x128xf32>
    %8 = arith.addf %5, %7 : vector<128x128xf32>
    %cst_6 = arith.constant 0.000000e+00 : f32
    %9 = vector.broadcast %cst_6 : f32 to vector<128x128xf32>
    %10 = arith.maximumf %8, %9 : vector<128x128xf32>
    %11 = arith.truncf %10 : vector<128x128xf32> to vector<128x128xbf16>
    %c0_7 = arith.constant 0 : index
    %c0_8 = arith.constant 0 : index
    %12 = vector.load %arg4[%c0_7, %c0_8] : memref<128x128xbf16, #tpu.memory_space<vmem>>, vector<128x128xbf16>
    %cst_9 = arith.constant dense<0.000000e+00> : vector<128x128xf32>
    %13 = tpu.matmul %11, %12, %cst_9 {dimension_numbers = #tpu.dot_dimension_numbers<[1], [0], [0], [1], [0, 0, 1, 1], [], []>} : vector<128x128xbf16>, vector<128x128xbf16>, vector<128x128xf32> -> vector<128x128xf32>
    %14 = arith.truncf %13 : vector<128x128xf32> to vector<128x128xbf16>
    %c0_10 = arith.constant 0 : index
    %c0_11 = arith.constant 0 : index
    %15 = vector.load %arg6[%c0_10, %c0_11] : memref<128x128xf32, #tpu.memory_space<vmem>>, vector<128x128xf32>
    %cst_12 = arith.constant dense<0.000000e+00> : vector<128x128xf32>
    %16 = tpu.matmul %3, %14, %cst_12 {dimension_numbers = #tpu.dot_dimension_numbers<[0], [0], [1], [1], [0, 1, 1, 1], [], []>} : vector<128x128xbf16>, vector<128x128xbf16>, vector<128x128xf32> -> vector<128x128xf32>
    %17 = arith.addf %15, %16 : vector<128x128xf32>
    %c0_13 = arith.constant 0 : index
    %c0_14 = arith.constant 0 : index
    %18 = vector.load %arg6[%c0_13, %c0_14] : memref<128x128xf32, #tpu.memory_space<vmem>>, vector<128x128xf32>
    tpu.vector_store %arg6[%c0_13, %c0_14], %17 {strides = array<i32>} : memref<128x128xf32, #tpu.memory_space<vmem>>, vector<128x128xf32>,
    return
  }
  func.func @transform_0(%arg0: i32) -> (i32, i32) {
    %c0_i32 = arith.constant 0 : i32
    %c0_i32_0 = arith.constant 0 : i32
    return %arg0, %c0_i32 : i32, i32
  }
  func.func @transform_1(%arg0: i32) -> (i32, i32) {
    %c0_i32 = arith.constant 0 : i32
    %c0_i32_0 = arith.constant 0 : i32
    %c0_i32_1 = arith.constant 0 : i32
    return %c0_i32, %c0_i32_0 : i32, i32
  }
  func.func @transform_2(%arg0: i32) -> (i32, i32) {
    %c0_i32 = arith.constant 0 : i32
    %c0_i32_0 = arith.constant 0 : i32
    %c0_i32_1 = arith.constant 0 : i32
    return %c0_i32, %c0_i32_0 : i32, i32
  }
  func.func @transform_3(%arg0: i32) -> (i32, i32) {
    %c0_i32 = arith.constant 0 : i32
    %c0_i32_0 = arith.constant 0 : i32
    %c0_i32_1 = arith.constant 0 : i32
    return %c0_i32, %c0_i32_0 : i32, i32
  }
  func.func @transform_4(%arg0: i32) -> (i32, i32) {
    %c0_i32 = arith.constant 0 : i32
    %c0_i32_0 = arith.constant 0 : i32
    %c0_i32_1 = arith.constant 0 : i32
    return %c0_i32, %c0_i32_0 : i32, i32
  }
  func.func @transform_5(%arg0: i32) -> (i32, i32) {
    %c0_i32 = arith.constant 0 : i32
    %c0_i32_0 = arith.constant 0 : i32
    %c0_i32_1 = arith.constant 0 : i32
    return %c0_i32, %c0_i32_0 : i32, i32
  }
}

</mosaic_0001>

<llo_original>
// kernel: gcn_forward.2
$region0: #{gcn_forward.2}
  #allocation0 [shape = 'u32[]', space=smem, size = 0x4, offset = 0x4, fixed_abs, tag = 'smem constant byte address 0x4 - core index']
  #allocation1 [shape = 'u32[144,128]{1,0:T(1,128)}', space=vmem, size = 0x12000, scoped, tag = 'internal scratch']
  %s0 = inlined_call_operand.vmem [shape: bf16[128,128], index: 0, kind: input, shape index: {}]
  %s1 = inlined_call_operand.vmem [shape: bf16[128,128], index: 1, kind: input, shape index: {}]
  %s2 = inlined_call_operand.vmem [shape: bf16[128,128], index: 2, kind: output, shape index: {}]
  %s3 = sld [smem:[#allocation0]]
  $region18: #{gcn_forward.2} parent=0
    _
  %s5 = ssub.s32 1, %s3
  %s6 = scalar_select 0, %s5, %s3
  // Predicated region
  $region2: #{gcn_forward.2} parent=0 // pred_check
    _
  $region3: #{gcn_forward.2} parent=0 // pred_check_branch
    %8 = sbr.rel (0) target = $region5
  $region4: #{gcn_forward.2} parent=0 // pred_region
    _
  $region5: #{gcn_forward.2} parent=0 // pred_fallthru
    _
  // Predicated region
  $region6: #{gcn_forward.2} parent=0 // pred_check
    _
  $region7: #{gcn_forward.2} parent=0 // pred_check_branch
    %10 = sbr.rel (0) target = $region9
  $region8: #{gcn_forward.2} parent=0 // pred_region
    _
  $region9: #{gcn_forward.2} parent=0 // pred_fallthru
    _
  %v12 = vld [vmem:[%s0] sm:$0xf]
  %v13 = vld [vmem:[%s0 + $0x4] sm:$0xf]
  %v14 = vld [vmem:[%s0 + $0x8] sm:$0xf]
  %v15 = vld [vmem:[%s0 + $0xc] sm:$0xf]
  %v16 = vld [vmem:[%s0 + $0x10] sm:$0xf]
  %v17 = vld [vmem:[%s0 + $0x14] sm:$0xf]
  %v18 = vld [vmem:[%s0 + $0x18] sm:$0xf]
  %v19 = vld [vmem:[%s0 + $0x1c] sm:$0xf]
  %v20 = vld [vmem:[%s0 + $0x20] sm:$0xf]
  %v21 = vld [vmem:[%s0 + $0x24] sm:$0xf]
  %v22 = vld [vmem:[%s0 + $0x28] sm:$0xf]
  %v23 = vld [vmem:[%s0 + $0x2c] sm:$0xf]
  %v24 = vld [vmem:[%s0 + $0x30] sm:$0xf]
  %v25 = vld [vmem:[%s0 + $0x34] sm:$0xf]
  %v26 = vld [vmem:[%s0 + $0x38] sm:$0xf]
  %v27 = vld [vmem:[%s0 + $0x3c] sm:$0xf]
  %v28 = vld [vmem:[%s1] sm:$0xf]
  %v29 = vld [vmem:[%s1 + $0x4] sm:$0xf]
  %v30 = vld [vmem:[%s1 + $0x8] sm:$0xf]
  %v31 = vld [vmem:[%s1 + $0xc] sm:$0xf]
  %v32 = vld [vmem:[%s1 + $0x10] sm:$0xf]
  %v33 = vld [vmem:[%s1 + $0x14] sm:$0xf]
  %v34 = vld [vmem:[%s1 + $0x18] sm:$0xf]
  %v35 = vld [vmem:[%s1 + $0x1c] sm:$0xf]
  %v36 = vld [vmem:[%s1 + $0x20] sm:$0xf]
  %v37 = vld [vmem:[%s1 + $0x24] sm:$0xf]
  %v38 = vld [vmem:[%s1 + $0x28] sm:$0xf]
  %v39 = vld [vmem:[%s1 + $0x2c] sm:$0xf]
  %v40 = vld [vmem:[%s1 + $0x30] sm:$0xf]
  %v41 = vld [vmem:[%s1 + $0x34] sm:$0xf]
  %v42 = vld [vmem:[%s1 + $0x38] sm:$0xf]
  %v43 = vld [vmem:[%s1 + $0x3c] sm:$0xf]
  %v60 = vunpack.c.l.b16 %v12
  %v61 = vunpack.c.l.b16 %v13
  %v62 = vunpack.c.l.b16 %v14
  %v63 = vunpack.c.l.b16 %v15
  %v64 = vunpack.c.l.b16 %v16
  %v65 = vunpack.c.l.b16 %v17
  %v66 = vunpack.c.l.b16 %v18
  %v67 = vunpack.c.l.b16 %v19
  %v68 = vunpack.c.l.b16 %v20
  %v69 = vunpack.c.l.b16 %v21
  %v70 = vunpack.c.l.b16 %v22
  %v71 = vunpack.c.l.b16 %v23
  %v72 = vunpack.c.l.b16 %v24
  %v73 = vunpack.c.l.b16 %v25
  %v74 = vunpack.c.l.b16 %v26
  %v75 = vunpack.c.l.b16 %v27
  %v76 = vpack.c.b16 %v61, %v60
  %v77 = vpack.c.b16 %v63, %v62
  %v78 = vpack.c.b16 %v65, %v64
  %v79 = vpack.c.b16 %v67, %v66
  %v80 = vpack.c.b16 %v69, %v68
  %v81 = vpack.c.b16 %v71, %v70
  %v82 = vpack.c.b16 %v73, %v72
  %v83 = vpack.c.b16 %v75, %v74
  %v108 = vunpack.c.l.b16 %v28
  %v109 = vunpack.c.l.b16 %v29
  %v110 = vunpack.c.l.b16 %v30
  %v111 = vunpack.c.l.b16 %v31
  %v112 = vunpack.c.l.b16 %v32
  %v113 = vunpack.c.l.b16 %v33
  %v114 = vunpack.c.l.b16 %v34
  %v115 = vunpack.c.l.b16 %v35
  %v116 = vunpack.c.l.b16 %v36
  %v117 = vunpack.c.l.b16 %v37
  %v118 = vunpack.c.l.b16 %v38
  %v119 = vunpack.c.l.b16 %v39
  %v120 = vunpack.c.l.b16 %v40
  %v121 = vunpack.c.l.b16 %v41
  %v122 = vunpack.c.l.b16 %v42
  %v123 = vunpack.c.l.b16 %v43
  %v124 = vpack.c.b16 %v109, %v108
  %v125 = vpack.c.b16 %v111, %v110
  %v126 = vpack.c.b16 %v113, %v112
  %v127 = vpack.c.b16 %v115, %v114
  %v128 = vpack.c.b16 %v117, %v116
  %v129 = vpack.c.b16 %v119, %v118
  %v130 = vpack.c.b16 %v121, %v120
  %v131 = vpack.c.b16 %v123, %v122
  %140 = vmatprep.subr.bf16.mxu0 0
  %141 = vmatpush1.bf16.msra.mxu0 %v124
  %142 = vmatprep.subr.bf16.mxu0 0
  %143 = vmatpush1.bf16.msra.mxu0 %v125
  %144 = vmatprep.subr.bf16.mxu0 0
  %145 = vmatpush1.bf16.msra.mxu0 %v126
  %146 = vmatprep.subr.bf16.mxu0 0
  %147 = vmatpush1.bf16.msra.mxu0 %v127
  %148 = vmatprep.subr.bf16.mxu0 0
  %149 = vmatpush1.bf16.msra.mxu0 %v128
  %150 = vmatprep.subr.bf16.mxu0 0
  %151 = vmatpush1.bf16.msra.mxu0 %v129
  %152 = vmatprep.subr.bf16.mxu0 0
  %153 = vmatpush1.bf16.msra.mxu0 %v130
  %154 = vmatprep.subr.bf16.mxu0 0
  %155 = vmatpush1.bf16.msra.mxu0 %v131
  %156 = vmatprep.subr.bf16.mxu0 0
  %157 = vmatpush1.bf16.msra.mxu0 0
  %158 = vmatprep.subr.bf16.mxu0 0
  %159 = vmatpush1.bf16.msra.mxu0 0
  %160 = vmatprep.subr.bf16.mxu0 0
  %161 = vmatpush1.bf16.msra.mxu0 0
  %162 = vmatprep.subr.bf16.mxu0 0
  %163 = vmatpush1.bf16.msra.mxu0 0
  %164 = vmatprep.subr.bf16.mxu0 0
  %165 = vmatpush1.bf16.msra.mxu0 0
  %166 = vmatprep.subr.bf16.mxu0 0
  %167 = vmatpush1.bf16.msra.mxu0 0
  %168 = vmatprep.subr.bf16.mxu0 0
  %169 = vmatpush1.bf16.msra.mxu0 0
  %170 = vmatprep.subr.bf16.mxu0 0
  %171 = vmatpush1.bf16.msra.mxu0 0
  %172 = vmatprep.mubr.bf16.mxu0 0
  %173 = vmatmul.mubr.bf16.gmra.mrb[0].mxu0 %v76
  %v174 = vpop.f32.mrb[0].mxu0
  %v175 = vadd.f32 0.0, %v174
  %v176 = vpop.f32.mrb[0].mxu0
  %v177 = vpop.f32.mrb[0].mxu0
  %v178 = vadd.f32 0.0, %v177
  %v179 = vpop.f32.mrb[0].mxu0
  %180 = vmatprep.mubr.bf16.mxu0 0
  %181 = vmatmul.mubr.bf16.gmra.mrb[0].mxu0 %v77
  %v182 = vpop.f32.mrb[0].mxu0
  %v183 = vadd.f32 0.0, %v182
  %v184 = vpop.f32.mrb[0].mxu0
  %v185 = vpop.f32.mrb[0].mxu0
  %v186 = vadd.f32 0.0, %v185
  %v187 = vpop.f32.mrb[0].mxu0
  %188 = vmatprep.mubr.bf16.mxu0 0
  %189 = vmatmul.mubr.bf16.gmra.mrb[0].mxu0 %v78
  %v190 = vpop.f32.mrb[0].mxu0
  %v191 = vadd.f32 0.0, %v190
  %v192 = vpop.f32.mrb[0].mxu0
  %v193 = vpop.f32.mrb[0].mxu0
  %v194 = vadd.f32 0.0, %v193
  %v195 = vpop.f32.mrb[0].mxu0
  %196 = vmatprep.mubr.bf16.mxu0 0
  %197 = vmatmul.mubr.bf16.gmra.mrb[0].mxu0 %v79
  %v198 = vpop.f32.mrb[0].mxu0
  %v199 = vadd.f32 0.0, %v198
  %v200 = vpop.f32.mrb[0].mxu0
  %v201 = vpop.f32.mrb[0].mxu0
  %v202 = vadd.f32 0.0, %v201
  %v203 = vpop.f32.mrb[0].mxu0
  %204 = vmatprep.mubr.bf16.mxu0 0
  %205 = vmatmul.mubr.bf16.gmra.mrb[0].mxu0 %v80
  %v206 = vpop.f32.mrb[0].mxu0
  %v207 = vadd.f32 0.0, %v206
  %v208 = vpop.f32.mrb[0].mxu0
  %v209 = vpop.f32.mrb[0].mxu0
  %v210 = vadd.f32 0.0, %v209
  %v211 = vpop.f32.mrb[0].mxu0
  %212 = vmatprep.mubr.bf16.mxu0 0
  %213 = vmatmul.mubr.bf16.gmra.mrb[0].mxu0 %v81
  %v214 = vpop.f32.mrb[0].mxu0
  %v215 = vadd.f32 0.0, %v214
  %v216 = vpop.f32.mrb[0].mxu0
  %v217 = vpop.f32.mrb[0].mxu0
  %v218 = vadd.f32 0.0, %v217
  %v219 = vpop.f32.mrb[0].mxu0
  %220 = vmatprep.mubr.bf16.mxu0 0
  %221 = vmatmul.mubr.bf16.gmra.mrb[0].mxu0 %v82
  %v222 = vpop.f32.mrb[0].mxu0
  %v223 = vadd.f32 0.0, %v222
  %v224 = vpop.f32.mrb[0].mxu0
  %v225 = vpop.f32.mrb[0].mxu0
  %v226 = vadd.f32 0.0, %v225
  %v227 = vpop.f32.mrb[0].mxu0
  %228 = vmatprep.mubr.bf16.mxu0 0
  %229 = vmatmul.mubr.bf16.gmra.mrb[0].mxu0 %v83
  %v230 = vpop.f32.mrb[0].mxu0
  %v231 = vadd.f32 0.0, %v230
  %v232 = vpop.f32.mrb[0].mxu0
  %v233 = vpop.f32.mrb[0].mxu0
  %v234 = vadd.f32 0.0, %v233
  %v235 = vpop.f32.mrb[0].mxu0
  %236 = vdwg.mxu0
  %v237 = vpack.c.bf16 %v178, %v175
  %v238 = vpack.c.bf16 %v186, %v183
  %v239 = vpack.c.bf16 %v194, %v191
  %v240 = vpack.c.bf16 %v202, %v199
  %v241 = vpack.c.bf16 %v210, %v207
  %v242 = vpack.c.bf16 %v218, %v215
  %v243 = vpack.c.bf16 %v226, %v223
  %v244 = vpack.c.bf16 %v234, %v231
  %v253 = vunpack.c.l.b16 %v237
  %v254 = vunpack.c.h.b16 %v237
  %v255 = vunpack.c.l.b16 %v238
  %v256 = vunpack.c.h.b16 %v238
  %v257 = vunpack.c.l.b16 %v239
  %v258 = vunpack.c.h.b16 %v239
  %v259 = vunpack.c.l.b16 %v240
  %v260 = vunpack.c.h.b16 %v240
  %v261 = vunpack.c.l.b16 %v241
  %v262 = vunpack.c.h.b16 %v241
  %v263 = vunpack.c.l.b16 %v242
  %v264 = vunpack.c.h.b16 %v242
  %v265 = vunpack.c.l.b16 %v243
  %v266 = vunpack.c.h.b16 %v243
  %v267 = vunpack.c.l.b16 %v244
  %v268 = vunpack.c.h.b16 %v244
  %v269 = vpack.c.b16 %v253, %v253
  %v270 = vpack.c.b16 %v254, %v254
  %v271 = vpack.c.b16 %v255, %v255
  %v272 = vpack.c.b16 %v256, %v256
  %v273 = vpack.c.b16 %v257, %v257
  %v274 = vpack.c.b16 %v258, %v258
  %v275 = vpack.c.b16 %v259, %v259
  %v276 = vpack.c.b16 %v260, %v260
  %v277 = vpack.c.b16 %v261, %v261
  %v278 = vpack.c.b16 %v262, %v262
  %v279 = vpack.c.b16 %v263, %v263
  %v280 = vpack.c.b16 %v264, %v264
  %v281 = vpack.c.b16 %v265, %v265
  %v282 = vpack.c.b16 %v266, %v266
  %v283 = vpack.c.b16 %v267, %v267
  %v284 = vpack.c.b16 %v268, %v268
  %301 = vst [vmem:[%s2] sm:$0xf] %v269
  %302 = vst [vmem:[%s2 + $0x4] sm:$0xf] %v270
  %303 = vst [vmem:[%s2 + $0x8] sm:$0xf] %v271
  %304 = vst [vmem:[%s2 + $0xc] sm:$0xf] %v272
  %305 = vst [vmem:[%s2 + $0x10] sm:$0xf] %v273
  %306 = vst [vmem:[%s2 + $0x14] sm:$0xf] %v274
  %307 = vst [vmem:[%s2 + $0x18] sm:$0xf] %v275
  %308 = vst [vmem:[%s2 + $0x1c] sm:$0xf] %v276
  %309 = vst [vmem:[%s2 + $0x20] sm:$0xf] %v277
  %310 = vst [vmem:[%s2 + $0x24] sm:$0xf] %v278
  %311 = vst [vmem:[%s2 + $0x28] sm:$0xf] %v279
  %312 = vst [vmem:[%s2 + $0x2c] sm:$0xf] %v280
  %313 = vst [vmem:[%s2 + $0x30] sm:$0xf] %v281
  %314 = vst [vmem:[%s2 + $0x34] sm:$0xf] %v282
  %315 = vst [vmem:[%s2 + $0x38] sm:$0xf] %v283
  %316 = vst [vmem:[%s2 + $0x3c] sm:$0xf] %v284
  // Predicated region
  $region10: #{gcn_forward.2} parent=0 // pred_check
    _
  $region11: #{gcn_forward.2} parent=0 // pred_check_branch
    %318 = sbr.rel (0) target = $region13
  $region12: #{gcn_forward.2} parent=0 // pred_region
    _
  $region13: #{gcn_forward.2} parent=0 // pred_fallthru
    _
  // Predicated region
  $region14: #{gcn_forward.2} parent=0 // pred_check
    _
  $region15: #{gcn_forward.2} parent=0 // pred_check_branch
    %320 = sbr.rel (0) target = $region17
  $region16: #{gcn_forward.2} parent=0 // pred_region
    _
  $region17: #{gcn_forward.2} parent=0 // pred_fallthru
    _

// kernel: gcn_forward.3
$region0: #{gcn_forward.3}
  #allocation0 [shape = 'u32[]', space=smem, size = 0x4, offset = 0x4, fixed_abs, tag = 'smem constant byte address 0x4 - core index']
  #allocation1 [shape = 'u32[144,128]{1,0:T(1,128)}', space=vmem, size = 0x12000, scoped, tag = 'internal scratch']
  %s0 = inlined_call_operand.vmem [shape: bf16[128,128], index: 0, kind: input, shape index: {}]
  %s1 = inlined_call_operand.vmem [shape: bf16[128,128], index: 1, kind: input, shape index: {}]
  %s2 = inlined_call_operand.vmem [shape: f32[1,128], index: 2, kind: input, shape index: {}]
  %s3 = inlined_call_operand.vmem [shape: bf16[128,128], index: 3, kind: input, shape index: {}]
  %s4 = inlined_call_operand.vmem [shape: f32[1,128], index: 4, kind: input, shape index: {}]
  %s5 = inlined_call_operand.vmem [shape: f32[128,128], index: 5, kind: output, shape index: {}]
  %s6 = sld [smem:[#allocation0]]
  $region34: #{gcn_forward.3} parent=0
    _
  %s8 = ssub.s32 1, %s6
  %s9 = scalar_select 0, %s8, %s6
  // Predicated region
  $region2: #{gcn_forward.3} parent=0 // pred_check
    _
  $region3: #{gcn_forward.3} parent=0 // pred_check_branch
    %11 = sbr.rel (0) target = $region5
  $region4: #{gcn_forward.3} parent=0 // pred_region
    _
  $region5: #{gcn_forward.3} parent=0 // pred_fallthru
    _
  // Predicated region
  $region6: #{gcn_forward.3} parent=0 // pred_check
    _
  $region7: #{gcn_forward.3} parent=0 // pred_check_branch
    %13 = sbr.rel (0) target = $region9
  $region8: #{gcn_forward.3} parent=0 // pred_region
    _
  $region9: #{gcn_forward.3} parent=0 // pred_fallthru
    _
  // Predicated region
  $region10: #{gcn_forward.3} parent=0 // pred_check
    _
  $region11: #{gcn_forward.3} parent=0 // pred_check_branch
    %15 = sbr.rel (0) target = $region13
  $region12: #{gcn_forward.3} parent=0 // pred_region
    _
  $region13: #{gcn_forward.3} parent=0 // pred_fallthru
    _
  // Predicated region
  $region14: #{gcn_forward.3} parent=0 // pred_check
    _
  $region15: #{gcn_forward.3} parent=0 // pred_check_branch
    %17 = sbr.rel (0) target = $region17
  $region16: #{gcn_forward.3} parent=0 // pred_region
    _
  $region17: #{gcn_forward.3} parent=0 // pred_fallthru
    _
  // Predicated region
  $region18: #{gcn_forward.3} parent=0 // pred_check
    _
  $region19: #{gcn_forward.3} parent=0 // pred_check_branch
    %19 = sbr.rel (0) target = $region21
  $region20: #{gcn_forward.3} parent=0 // pred_region
    _
  $region21: #{gcn_forward.3} parent=0 // pred_fallthru
    _
  %p21 = scmp.eq.s32.totalorder 0, 0
  // Predicated region
  $region22: #{gcn_forward.3} parent=0 // pred_check
    %p22 = pneg %p21
  $region23: #{gcn_forward.3} parent=0 // pred_check_branch
    %24 = sbr.rel (%p22) target = $region25
  $region24: #{gcn_forward.3} parent=0 // pred_region
    %v25 = vld [vmem:[%s4] sm:$0x1]
    %v27 = vlaneseq
    %v28 = vshrl.u32 %v27, 7
    %v29 = vsub.s32 0, %v28
    %v30 = vrot.slane %v25, %v29
    %32 = vst [vmem:[%s5] sm:$0xff] %v30
    %33 = vst [vmem:[%s5 + $0x8] sm:$0xff] %v30
    %34 = vst [vmem:[%s5 + $0x10] sm:$0xff] %v30
    %35 = vst [vmem:[%s5 + $0x18] sm:$0xff] %v30
    %36 = vst [vmem:[%s5 + $0x20] sm:$0xff] %v30
    %37 = vst [vmem:[%s5 + $0x28] sm:$0xff] %v30
    %38 = vst [vmem:[%s5 + $0x30] sm:$0xff] %v30
    %39 = vst [vmem:[%s5 + $0x38] sm:$0xff] %v30
    %40 = vst [vmem:[%s5 + $0x40] sm:$0xff] %v30
    %41 = vst [vmem:[%s5 + $0x48] sm:$0xff] %v30
    %42 = vst [vmem:[%s5 + $0x50] sm:$0xff] %v30
    %43 = vst [vmem:[%s5 + $0x58] sm:$0xff] %v30
    %44 = vst [vmem:[%s5 + $0x60] sm:$0xff] %v30
    %45 = vst [vmem:[%s5 + $0x68] sm:$0xff] %v30
    %46 = vst [vmem:[%s5 + $0x70] sm:$0xff] %v30
    %47 = vst [vmem:[%s5 + $0x78] sm:$0xff] %v30
  $region25: #{gcn_forward.3} parent=0 // pred_fallthru
    _
  %v48 = vld [vmem:[%s0] sm:$0xf]
  %v49 = vld [vmem:[%s0 + $0x4] sm:$0xf]
  %v50 = vld [vmem:[%s0 + $0x8] sm:$0xf]
  %v51 = vld [vmem:[%s0 + $0xc] sm:$0xf]
  %v52 = vld [vmem:[%s0 + $0x10] sm:$0xf]
  %v53 = vld [vmem:[%s0 + $0x14] sm:$0xf]
  %v54 = vld [vmem:[%s0 + $0x18] sm:$0xf]
  %v55 = vld [vmem:[%s0 + $0x1c] sm:$0xf]
  %v56 = vld [vmem:[%s0 + $0x20] sm:$0xf]
  %v57 = vld [vmem:[%s0 + $0x24] sm:$0xf]
  %v58 = vld [vmem:[%s0 + $0x28] sm:$0xf]
  %v59 = vld [vmem:[%s0 + $0x2c] sm:$0xf]
  %v60 = vld [vmem:[%s0 + $0x30] sm:$0xf]
  %v61 = vld [vmem:[%s0 + $0x34] sm:$0xf]
  %v62 = vld [vmem:[%s0 + $0x38] sm:$0xf]
  %v63 = vld [vmem:[%s0 + $0x3c] sm:$0xf]
  %v64 = vld [vmem:[%s1] sm:$0xf]
  %v65 = vld [vmem:[%s1 + $0x4] sm:$0xf]
  %v66 = vld [vmem:[%s1 + $0x8] sm:$0xf]
  %v67 = vld [vmem:[%s1 + $0xc] sm:$0xf]
  %v68 = vld [vmem:[%s1 + $0x10] sm:$0xf]
  %v69 = vld [vmem:[%s1 + $0x14] sm:$0xf]
  %v70 = vld [vmem:[%s1 + $0x18] sm:$0xf]
  %v71 = vld [vmem:[%s1 + $0x1c] sm:$0xf]
  %v72 = vld [vmem:[%s1 + $0x20] sm:$0xf]
  %v73 = vld [vmem:[%s1 + $0x24] sm:$0xf]
  %v74 = vld [vmem:[%s1 + $0x28] sm:$0xf]
  %v75 = vld [vmem:[%s1 + $0x2c] sm:$0xf]
  %v76 = vld [vmem:[%s1 + $0x30] sm:$0xf]
  %v77 = vld [vmem:[%s1 + $0x34] sm:$0xf]
  %v78 = vld [vmem:[%s1 + $0x38] sm:$0xf]
  %v79 = vld [vmem:[%s1 + $0x3c] sm:$0xf]
  %v80 = vld [vmem:[%s2] sm:$0x1]
  %v82 = vlaneseq
  %v83 = vshrl.u32 %v82, 7
  %v84 = vsub.s32 0, %v83
  %v85 = vrot.slane %v80, %v84
  %v103 = vunpack.c.l.b16 %v48
  %v104 = vunpack.c.l.b16 %v49
  %v105 = vunpack.c.l.b16 %v50
  %v106 = vunpack.c.l.b16 %v51
  %v107 = vunpack.c.l.b16 %v52
  %v108 = vunpack.c.l.b16 %v53
  %v109 = vunpack.c.l.b16 %v54
  %v110 = vunpack.c.l.b16 %v55
  %v111 = vunpack.c.l.b16 %v56
  %v112 = vunpack.c.l.b16 %v57
  %v113 = vunpack.c.l.b16 %v58
  %v114 = vunpack.c.l.b16 %v59
  %v115 = vunpack.c.l.b16 %v60
  %v116 = vunpack.c.l.b16 %v61
  %v117 = vunpack.c.l.b16 %v62
  %v118 = vunpack.c.l.b16 %v63
  %v119 = vpack.c.b16 %v104, %v103
  %v120 = vpack.c.b16 %v106, %v105
  %v121 = vpack.c.b16 %v108, %v107
  %v122 = vpack.c.b16 %v110, %v109
  %v123 = vpack.c.b16 %v112, %v111
  %v124 = vpack.c.b16 %v114, %v113
  %v125 = vpack.c.b16 %v116, %v115
  %v126 = vpack.c.b16 %v118, %v117
  %v151 = vunpack.c.l.b16 %v64
  %v152 = vunpack.c.l.b16 %v65
  %v153 = vunpack.c.l.b16 %v66
  %v154 = vunpack.c.l.b16 %v67
  %v155 = vunpack.c.l.b16 %v68
  %v156 = vunpack.c.l.b16 %v69
  %v157 = vunpack.c.l.b16 %v70
  %v158 = vunpack.c.l.b16 %v71
  %v159 = vunpack.c.l.b16 %v72
  %v160 = vunpack.c.l.b16 %v73
  %v161 = vunpack.c.l.b16 %v74
  %v162 = vunpack.c.l.b16 %v75
  %v163 = vunpack.c.l.b16 %v76
  %v164 = vunpack.c.l.b16 %v77
  %v165 = vunpack.c.l.b16 %v78
  %v166 = vunpack.c.l.b16 %v79
  %v167 = vpack.c.b16 %v152, %v151
  %v168 = vpack.c.b16 %v154, %v153
  %v169 = vpack.c.b16 %v156, %v155
  %v170 = vpack.c.b16 %v158, %v157
  %v171 = vpack.c.b16 %v160, %v159
  %v172 = vpack.c.b16 %v162, %v161
  %v173 = vpack.c.b16 %v164, %v163
  %v174 = vpack.c.b16 %v166, %v165
  %183 = vmatprep.subr.bf16.mxu0 0
  %184 = vmatpush1.bf16.msra.mxu0 %v167
  %185 = vmatprep.subr.bf16.mxu0 0
  %186 = vmatpush1.bf16.msra.mxu0 %v168
  %187 = vmatprep.subr.bf16.mxu0 0
  %188 = vmatpush1.bf16.msra.mxu0 %v169
  %189 = vmatprep.subr.bf16.mxu0 0
  %190 = vmatpush1.bf16.msra.mxu0 %v170
  %191 = vmatprep.subr.bf16.mxu0 0
  %192 = vmatpush1.bf16.msra.mxu0 %v171
  %193 = vmatprep.subr.bf16.mxu0 0
  %194 = vmatpush1.bf16.msra.mxu0 %v172
  %195 = vmatprep.subr.bf16.mxu0 0
  %196 = vmatpush1.bf16.msra.mxu0 %v173
  %197 = vmatprep.subr.bf16.mxu0 0
  %198 = vmatpush1.bf16.msra.mxu0 %v174
  %199 = vmatprep.subr.bf16.mxu0 0
  %200 = vmatpush1.bf16.msra.mxu0 0
  %201 = vmatprep.subr.bf16.mxu0 0
  %202 = vmatpush1.bf16.msra.mxu0 0
  %203 = vmatprep.subr.bf16.mxu0 0
  %204 = vmatpush1.bf16.msra.mxu0 0
  %205 = vmatprep.subr.bf16.mxu0 0
  %206 = vmatpush1.bf16.msra.mxu0 0
  %207 = vmatprep.subr.bf16.mxu0 0
  %208 = vmatpush1.bf16.msra.mxu0 0
  %209 = vmatprep.subr.bf16.mxu0 0
  %210 = vmatpush1.bf16.msra.mxu0 0
  %211 = vmatprep.subr.bf16.mxu0 0
  %212 = vmatpush1.bf16.msra.mxu0 0
  %213 = vmatprep.subr.bf16.mxu0 0
  %214 = vmatpush1.bf16.msra.mxu0 0
  %215 = vmatprep.mubr.bf16.mxu0 0
  %216 = vmatmul.mubr.bf16.gmra.mrb[0].mxu0 %v119
  %v217 = vpop.f32.mrb[0].mxu0
  %v218 = vadd.f32 %v85, %v217
  %v219 = vpop.f32.mrb[0].mxu0
  %v220 = vpop.f32.mrb[0].mxu0
  %v221 = vadd.f32 %v85, %v220
  %v222 = vpop.f32.mrb[0].mxu0
  %223 = vmatprep.mubr.bf16.mxu0 0
  %224 = vmatmul.mubr.bf16.gmra.mrb[0].mxu0 %v120
  %v225 = vpop.f32.mrb[0].mxu0
  %v226 = vadd.f32 %v85, %v225
  %v227 = vpop.f32.mrb[0].mxu0
  %v228 = vpop.f32.mrb[0].mxu0
  %v229 = vadd.f32 %v85, %v228
  %v230 = vpop.f32.mrb[0].mxu0
  %231 = vmatprep.mubr.bf16.mxu0 0
  %232 = vmatmul.mubr.bf16.gmra.mrb[0].mxu0 %v121
  %v233 = vpop.f32.mrb[0].mxu0
  %v234 = vadd.f32 %v85, %v233
  %v235 = vpop.f32.mrb[0].mxu0
  %v236 = vpop.f32.mrb[0].mxu0
  %v237 = vadd.f32 %v85, %v236
  %v238 = vpop.f32.mrb[0].mxu0
  %239 = vmatprep.mubr.bf16.mxu0 0
  %240 = vmatmul.mubr.bf16.gmra.mrb[0].mxu0 %v122
  %v241 = vpop.f32.mrb[0].mxu0
  %v242 = vadd.f32 %v85, %v241
  %v243 = vpop.f32.mrb[0].mxu0
  %v244 = vpop.f32.mrb[0].mxu0
  %v245 = vadd.f32 %v85, %v244
  %v246 = vpop.f32.mrb[0].mxu0
  %247 = vmatprep.mubr.bf16.mxu0 0
  %248 = vmatmul.mubr.bf16.gmra.mrb[0].mxu0 %v123
  %v249 = vpop.f32.mrb[0].mxu0
  %v250 = vadd.f32 %v85, %v249
  %v251 = vpop.f32.mrb[0].mxu0
  %v252 = vpop.f32.mrb[0].mxu0
  %v253 = vadd.f32 %v85, %v252
  %v254 = vpop.f32.mrb[0].mxu0
  %255 = vmatprep.mubr.bf16.mxu0 0
  %256 = vmatmul.mubr.bf16.gmra.mrb[0].mxu0 %v124
  %v257 = vpop.f32.mrb[0].mxu0
  %v258 = vadd.f32 %v85, %v257
  %v259 = vpop.f32.mrb[0].mxu0
  %v260 = vpop.f32.mrb[0].mxu0
  %v261 = vadd.f32 %v85, %v260
  %v262 = vpop.f32.mrb[0].mxu0
  %263 = vmatprep.mubr.bf16.mxu0 0
  %264 = vmatmul.mubr.bf16.gmra.mrb[0].mxu0 %v125
  %v265 = vpop.f32.mrb[0].mxu0
  %v266 = vadd.f32 %v85, %v265
  %v267 = vpop.f32.mrb[0].mxu0
  %v268 = vpop.f32.mrb[0].mxu0
  %v269 = vadd.f32 %v85, %v268
  %v270 = vpop.f32.mrb[0].mxu0
  %271 = vmatprep.mubr.bf16.mxu0 0
  %272 = vmatmul.mubr.bf16.gmra.mrb[0].mxu0 %v126
  %v273 = vpop.f32.mrb[0].mxu0
  %v274 = vadd.f32 %v85, %v273
  %v275 = vpop.f32.mrb[0].mxu0
  %v276 = vpop.f32.mrb[0].mxu0
  %v277 = vadd.f32 %v85, %v276
  %v278 = vpop.f32.mrb[0].mxu0
  %279 = vdwg.mxu0
  %v280 = vmax.f32 %v218, 0.0
  %v281 = vmax.f32 %v221, 0.0
  %v282 = vmax.f32 %v226, 0.0
  %v283 = vmax.f32 %v229, 0.0
  %v284 = vmax.f32 %v234, 0.0
  %v285 = vmax.f32 %v237, 0.0
  %v286 = vmax.f32 %v242, 0.0
  %v287 = vmax.f32 %v245, 0.0
  %v288 = vmax.f32 %v250, 0.0
  %v289 = vmax.f32 %v253, 0.0
  %v290 = vmax.f32 %v258, 0.0
  %v291 = vmax.f32 %v261, 0.0
  %v292 = vmax.f32 %v266, 0.0
  %v293 = vmax.f32 %v269, 0.0
  %v294 = vmax.f32 %v274, 0.0
  %v295 = vmax.f32 %v277, 0.0
  %v296 = vpack.c.bf16 %v281, %v280
  %v297 = vpack.c.bf16 %v283, %v282
  %v298 = vpack.c.bf16 %v285, %v284
  %v299 = vpack.c.bf16 %v287, %v286
  %v300 = vpack.c.bf16 %v289, %v288
  %v301 = vpack.c.bf16 %v291, %v290
  %v302 = vpack.c.bf16 %v293, %v292
  %v303 = vpack.c.bf16 %v295, %v294
  %v304 = vld [vmem:[%s3] sm:$0xf]
  %v305 = vld [vmem:[%s3 + $0x4] sm:$0xf]
  %v306 = vld [vmem:[%s3 + $0x8] sm:$0xf]
  %v307 = vld [vmem:[%s3 + $0xc] sm:$0xf]
  %v308 = vld [vmem:[%s3 + $0x10] sm:$0xf]
  %v309 = vld [vmem:[%s3 + $0x14] sm:$0xf]
  %v310 = vld [vmem:[%s3 + $0x18] sm:$0xf]
  %v311 = vld [vmem:[%s3 + $0x1c] sm:$0xf]
  %v312 = vld [vmem:[%s3 + $0x20] sm:$0xf]
  %v313 = vld [vmem:[%s3 + $0x24] sm:$0xf]
  %v314 = vld [vmem:[%s3 + $0x28] sm:$0xf]
  %v315 = vld [vmem:[%s3 + $0x2c] sm:$0xf]
  %v316 = vld [vmem:[%s3 + $0x30] sm:$0xf]
  %v317 = vld [vmem:[%s3 + $0x34] sm:$0xf]
  %v318 = vld [vmem:[%s3 + $0x38] sm:$0xf]
  %v319 = vld [vmem:[%s3 + $0x3c] sm:$0xf]
  %v336 = vunpack.c.l.b16 %v304
  %v337 = vunpack.c.l.b16 %v305
  %v338 = vunpack.c.l.b16 %v306
  %v339 = vunpack.c.l.b16 %v307
  %v340 = vunpack.c.l.b16 %v308
  %v341 = vunpack.c.l.b16 %v309
  %v342 = vunpack.c.l.b16 %v310
  %v343 = vunpack.c.l.b16 %v311
  %v344 = vunpack.c.l.b16 %v312
  %v345 = vunpack.c.l.b16 %v313
  %v346 = vunpack.c.l.b16 %v314
  %v347 = vunpack.c.l.b16 %v315
  %v348 = vunpack.c.l.b16 %v316
  %v349 = vunpack.c.l.b16 %v317
  %v350 = vunpack.c.l.b16 %v318
  %v351 = vunpack.c.l.b16 %v319
  %v352 = vpack.c.b16 %v337, %v336
  %v353 = vpack.c.b16 %v339, %v338
  %v354 = vpack.c.b16 %v341, %v340
  %v355 = vpack.c.b16 %v343, %v342
  %v356 = vpack.c.b16 %v345, %v344
  %v357 = vpack.c.b16 %v347, %v346
  %v358 = vpack.c.b16 %v349, %v348
  %v359 = vpack.c.b16 %v351, %v350
  %368 = vmatprep.subr.bf16.mxu0 0
  %369 = vmatpush1.bf16.msra.mxu0 %v352
  %370 = vmatprep.subr.bf16.mxu0 0
  %371 = vmatpush1.bf16.msra.mxu0 %v353
  %372 = vmatprep.subr.bf16.mxu0 0
  %373 = vmatpush1.bf16.msra.mxu0 %v354
  %374 = vmatprep.subr.bf16.mxu0 0
  %375 = vmatpush1.bf16.msra.mxu0 %v355
  %376 = vmatprep.subr.bf16.mxu0 0
  %377 = vmatpush1.bf16.msra.mxu0 %v356
  %378 = vmatprep.subr.bf16.mxu0 0
  %379 = vmatpush1.bf16.msra.mxu0 %v357
  %380 = vmatprep.subr.bf16.mxu0 0
  %381 = vmatpush1.bf16.msra.mxu0 %v358
  %382 = vmatprep.subr.bf16.mxu0 0
  %383 = vmatpush1.bf16.msra.mxu0 %v359
  %384 = vmatprep.subr.bf16.mxu0 0
  %385 = vmatpush1.bf16.msra.mxu0 0
  %386 = vmatprep.subr.bf16.mxu0 0
  %387 = vmatpush1.bf16.msra.mxu0 0
  %388 = vmatprep.subr.bf16.mxu0 0
  %389 = vmatpush1.bf16.msra.mxu0 0
  %390 = vmatprep.subr.bf16.mxu0 0
  %391 = vmatpush1.bf16.msra.mxu0 0
  %392 = vmatprep.subr.bf16.mxu0 0
  %393 = vmatpush1.bf16.msra.mxu0 0
  %394 = vmatprep.subr.bf16.mxu0 0
  %395 = vmatpush1.bf16.msra.mxu0 0
  %396 = vmatprep.subr.bf16.mxu0 0
  %397 = vmatpush1.bf16.msra.mxu0 0
  %398 = vmatprep.subr.bf16.mxu0 0
  %399 = vmatpush1.bf16.msra.mxu0 0
  %400 = vmatprep.mubr.bf16.mxu0 0
  %401 = vmatmul.mubr.bf16.gmra.mrb[0].mxu0 %v296
  %v402 = vpop.f32.mrb[0].mxu0
  %v403 = vadd.f32 0.0, %v402
  %v404 = vpop.f32.mrb[0].mxu0
  %v405 = vpop.f32.mrb[0].mxu0
  %v406 = vadd.f32 0.0, %v405
  %v407 = vpop.f32.mrb[0].mxu0
  %408 = vmatprep.mubr.bf16.mxu0 0
  %409 = vmatmul.mubr.bf16.gmra.mrb[0].mxu0 %v297
  %v410 = vpop.f32.mrb[0].mxu0
  %v411 = vadd.f32 0.0, %v410
  %v412 = vpop.f32.mrb[0].mxu0
  %v413 = vpop.f32.mrb[0].mxu0
  %v414 = vadd.f32 0.0, %v413
  %v415 = vpop.f32.mrb[0].mxu0
  %416 = vmatprep.mubr.bf16.mxu0 0
  %417 = vmatmul.mubr.bf16.gmra.mrb[0].mxu0 %v298
  %v418 = vpop.f32.mrb[0].mxu0
  %v419 = vadd.f32 0.0, %v418
  %v420 = vpop.f32.mrb[0].mxu0
  %v421 = vpop.f32.mrb[0].mxu0
  %v422 = vadd.f32 0.0, %v421
  %v423 = vpop.f32.mrb[0].mxu0
  %424 = vmatprep.mubr.bf16.mxu0 0
  %425 = vmatmul.mubr.bf16.gmra.mrb[0].mxu0 %v299
  %v426 = vpop.f32.mrb[0].mxu0
  %v427 = vadd.f32 0.0, %v426
  %v428 = vpop.f32.mrb[0].mxu0
  %v429 = vpop.f32.mrb[0].mxu0
  %v430 = vadd.f32 0.0, %v429
  %v431 = vpop.f32.mrb[0].mxu0
  %432 = vmatprep.mubr.bf16.mxu0 0
  %433 = vmatmul.mubr.bf16.gmra.mrb[0].mxu0 %v300
  %v434 = vpop.f32.mrb[0].mxu0
  %v435 = vadd.f32 0.0, %v434
  %v436 = vpop.f32.mrb[0].mxu0
  %v437 = vpop.f32.mrb[0].mxu0
  %v438 = vadd.f32 0.0, %v437
  %v439 = vpop.f32.mrb[0].mxu0
  %440 = vmatprep.mubr.bf16.mxu0 0
  %441 = vmatmul.mubr.bf16.gmra.mrb[0].mxu0 %v301
  %v442 = vpop.f32.mrb[0].mxu0
  %v443 = vadd.f32 0.0, %v442
  %v444 = vpop.f32.mrb[0].mxu0
  %v445 = vpop.f32.mrb[0].mxu0
  %v446 = vadd.f32 0.0, %v445
  %v447 = vpop.f32.mrb[0].mxu0
  %448 = vmatprep.mubr.bf16.mxu0 0
  %449 = vmatmul.mubr.bf16.gmra.mrb[0].mxu0 %v302
  %v450 = vpop.f32.mrb[0].mxu0
  %v451 = vadd.f32 0.0, %v450
  %v452 = vpop.f32.mrb[0].mxu0
  %v453 = vpop.f32.mrb[0].mxu0
  %v454 = vadd.f32 0.0, %v453
  %v455 = vpop.f32.mrb[0].mxu0
  %456 = vmatprep.mubr.bf16.mxu0 0
  %457 = vmatmul.mubr.bf16.gmra.mrb[0].mxu0 %v303
  %v458 = vpop.f32.mrb[0].mxu0
  %v459 = vadd.f32 0.0, %v458
  %v460 = vpop.f32.mrb[0].mxu0
  %v461 = vpop.f32.mrb[0].mxu0
  %v462 = vadd.f32 0.0, %v461
  %v463 = vpop.f32.mrb[0].mxu0
  %464 = vdwg.mxu0
  %v465 = vpack.c.bf16 %v406, %v403
  %v466 = vpack.c.bf16 %v414, %v411
  %v467 = vpack.c.bf16 %v422, %v419
  %v468 = vpack.c.bf16 %v430, %v427
  %v469 = vpack.c.bf16 %v438, %v435
  %v470 = vpack.c.bf16 %v446, %v443
  %v471 = vpack.c.bf16 %v454, %v451
  %v472 = vpack.c.bf16 %v462, %v459
  %v473 = vld [vmem:[%s5] sm:$0xff]
  %v474 = vld [vmem:[%s5 + $0x8] sm:$0xff]
  %v475 = vld [vmem:[%s5 + $0x10] sm:$0xff]
  %v476 = vld [vmem:[%s5 + $0x18] sm:$0xff]
  %v477 = vld [vmem:[%s5 + $0x20] sm:$0xff]
  %v478 = vld [vmem:[%s5 + $0x28] sm:$0xff]
  %v479 = vld [vmem:[%s5 + $0x30] sm:$0xff]
  %v480 = vld [vmem:[%s5 + $0x38] sm:$0xff]
  %v481 = vld [vmem:[%s5 + $0x40] sm:$0xff]
  %v482 = vld [vmem:[%s5 + $0x48] sm:$0xff]
  %v483 = vld [vmem:[%s5 + $0x50] sm:$0xff]
  %v484 = vld [vmem:[%s5 + $0x58] sm:$0xff]
  %v485 = vld [vmem:[%s5 + $0x60] sm:$0xff]
  %v486 = vld [vmem:[%s5 + $0x68] sm:$0xff]
  %v487 = vld [vmem:[%s5 + $0x70] sm:$0xff]
  %v488 = vld [vmem:[%s5 + $0x78] sm:$0xff]
  %489 = vxpose.xlu0.c.b16.start [1/8] %v119, 128
  %490 = vxpose.xlu0.c.b16.cont [2/8] %v120, 128
  %491 = vxpose.xlu0.c.b16.cont [3/8] %v121, 128
  %492 = vxpose.xlu0.c.b16.cont [4/8] %v122, 128
  %493 = vxpose.xlu0.c.b16.cont [5/8] %v123, 128
  %494 = vxpose.xlu0.c.b16.cont [6/8] %v124, 128
  %495 = vxpose.xlu0.c.b16.cont [7/8] %v125, 128
  %496 = vxpose.xlu0.c.b16.end [8/8] %v126, 128
  %v497 = vpop.trf.xlu0
  %v498 = vpop.trf.xlu0
  %v499 = vpop.trf.xlu0
  %v500 = vpop.trf.xlu0
  %v501 = vpop.trf.xlu0
  %v502 = vpop.trf.xlu0
  %v503 = vpop.trf.xlu0
  %v504 = vpop.trf.xlu0
  %505 = vmatprep.subr.bf16.mxu0 0
  %506 = vmatpush1.bf16.msra.mxu0 %v465
  %507 = vmatprep.subr.bf16.mxu0 0
  %508 = vmatpush1.bf16.msra.mxu0 %v466
  %509 = vmatprep.subr.bf16.mxu0 0
  %510 = vmatpush1.bf16.msra.mxu0 %v467
  %511 = vmatprep.subr.bf16.mxu0 0
  %512 = vmatpush1.bf16.msra.mxu0 %v468
  %513 = vmatprep.subr.bf16.mxu0 0
  %514 = vmatpush1.bf16.msra.mxu0 %v469
  %515 = vmatprep.subr.bf16.mxu0 0
  %516 = vmatpush1.bf16.msra.mxu0 %v470
  %517 = vmatprep.subr.bf16.mxu0 0
  %518 = vmatpush1.bf16.msra.mxu0 %v471
  %519 = vmatprep.subr.bf16.mxu0 0
  %520 = vmatpush1.bf16.msra.mxu0 %v472
  %521 = vmatprep.subr.bf16.mxu0 0
  %522 = vmatpush1.bf16.msra.mxu0 0
  %523 = vmatprep.subr.bf16.mxu0 0
  %524 = vmatpush1.bf16.msra.mxu0 0
  %525 = vmatprep.subr.bf16.mxu0 0
  %526 = vmatpush1.bf16.msra.mxu0 0
  %527 = vmatprep.subr.bf16.mxu0 0
  %528 = vmatpush1.bf16.msra.mxu0 0
  %529 = vmatprep.subr.bf16.mxu0 0
  %530 = vmatpush1.bf16.msra.mxu0 0
  %531 = vmatprep.subr.bf16.mxu0 0
  %532 = vmatpush1.bf16.msra.mxu0 0
  %533 = vmatprep.subr.bf16.mxu0 0
  %534 = vmatpush1.bf16.msra.mxu0 0
  %535 = vmatprep.subr.bf16.mxu0 0
  %536 = vmatpush1.bf16.msra.mxu0 0
  %537 = vmatprep.mubr.bf16.mxu0 0
  %538 = vmatmul.mubr.bf16.gmra.mrb[0].mxu0 %v497
  %v539 = vpop.f32.mrb[0].mxu0
  %v540 = vadd.f32 0.0, %v539
  %v541 = vpop.f32.mrb[0].mxu0
  %v542 = vpop.f32.mrb[0].mxu0
  %v543 = vadd.f32 0.0, %v542
  %v544 = vpop.f32.mrb[0].mxu0
  %545 = vmatprep.mubr.bf16.mxu0 0
  %546 = vmatmul.mubr.bf16.gmra.mrb[0].mxu0 %v498
  %v547 = vpop.f32.mrb[0].mxu0
  %v548 = vadd.f32 0.0, %v547
  %v549 = vpop.f32.mrb[0].mxu0
  %v550 = vpop.f32.mrb[0].mxu0
  %v551 = vadd.f32 0.0, %v550
  %v552 = vpop.f32.mrb[0].mxu0
  %553 = vmatprep.mubr.bf16.mxu0 0
  %554 = vmatmul.mubr.bf16.gmra.mrb[0].mxu0 %v499
  %v555 = vpop.f32.mrb[0].mxu0
  %v556 = vadd.f32 0.0, %v555
  %v557 = vpop.f32.mrb[0].mxu0
  %v558 = vpop.f32.mrb[0].mxu0
  %v559 = vadd.f32 0.0, %v558
  %v560 = vpop.f32.mrb[0].mxu0
  %561 = vmatprep.mubr.bf16.mxu0 0
  %562 = vmatmul.mubr.bf16.gmra.mrb[0].mxu0 %v500
  %v563 = vpop.f32.mrb[0].mxu0
  %v564 = vadd.f32 0.0, %v563
  %v565 = vpop.f32.mrb[0].mxu0
  %v566 = vpop.f32.mrb[0].mxu0
  %v567 = vadd.f32 0.0, %v566
  %v568 = vpop.f32.mrb[0].mxu0
  %569 = vmatprep.mubr.bf16.mxu0 0
  %570 = vmatmul.mubr.bf16.gmra.mrb[0].mxu0 %v501
  %v571 = vpop.f32.mrb[0].mxu0
  %v572 = vadd.f32 0.0, %v571
  %v573 = vpop.f32.mrb[0].mxu0
  %v574 = vpop.f32.mrb[0].mxu0
  %v575 = vadd.f32 0.0, %v574
  %v576 = vpop.f32.mrb[0].mxu0
  %577 = vmatprep.mubr.bf16.mxu0 0
  %578 = vmatmul.mubr.bf16.gmra.mrb[0].mxu0 %v502
  %v579 = vpop.f32.mrb[0].mxu0
  %v580 = vadd.f32 0.0, %v579
  %v581 = vpop.f32.mrb[0].mxu0
  %v582 = vpop.f32.mrb[0].mxu0
  %v583 = vadd.f32 0.0, %v582
  %v584 = vpop.f32.mrb[0].mxu0
  %585 = vmatprep.mubr.bf16.mxu0 0
  %586 = vmatmul.mubr.bf16.gmra.mrb[0].mxu0 %v503
  %v587 = vpop.f32.mrb[0].mxu0
  %v588 = vadd.f32 0.0, %v587
  %v589 = vpop.f32.mrb[0].mxu0
  %v590 = vpop.f32.mrb[0].mxu0
  %v591 = vadd.f32 0.0, %v590
  %v592 = vpop.f32.mrb[0].mxu0
  %593 = vmatprep.mubr.bf16.mxu0 0
  %594 = vmatmul.mubr.bf16.gmra.mrb[0].mxu0 %v504
  %v595 = vpop.f32.mrb[0].mxu0
  %v596 = vadd.f32 0.0, %v595
  %v597 = vpop.f32.mrb[0].mxu0
  %v598 = vpop.f32.mrb[0].mxu0
  %v599 = vadd.f32 0.0, %v598
  %v600 = vpop.f32.mrb[0].mxu0
  %601 = vdwg.mxu0
  %v602 = vadd.f32 %v473, %v540
  %v603 = vadd.f32 %v474, %v543
  %v604 = vadd.f32 %v475, %v548
  %v605 = vadd.f32 %v476, %v551
  %v606 = vadd.f32 %v477, %v556
  %v607 = vadd.f32 %v478, %v559
  %v608 = vadd.f32 %v479, %v564
  %v609 = vadd.f32 %v480, %v567
  %v610 = vadd.f32 %v481, %v572
  %v611 = vadd.f32 %v482, %v575
  %v612 = vadd.f32 %v483, %v580
  %v613 = vadd.f32 %v484, %v583
  %v614 = vadd.f32 %v485, %v588
  %v615 = vadd.f32 %v486, %v591
  %v616 = vadd.f32 %v487, %v596
  %v617 = vadd.f32 %v488, %v599
  %618 = vst [vmem:[%s5] sm:$0xff] %v602
  %619 = vst [vmem:[%s5 + $0x8] sm:$0xff] %v603
  %620 = vst [vmem:[%s5 + $0x10] sm:$0xff] %v604
  %621 = vst [vmem:[%s5 + $0x18] sm:$0xff] %v605
  %622 = vst [vmem:[%s5 + $0x20] sm:$0xff] %v606
  %623 = vst [vmem:[%s5 + $0x28] sm:$0xff] %v607
  %624 = vst [vmem:[%s5 + $0x30] sm:$0xff] %v608
  %625 = vst [vmem:[%s5 + $0x38] sm:$0xff] %v609
  %626 = vst [vmem:[%s5 + $0x40] sm:$0xff] %v610
  %627 = vst [vmem:[%s5 + $0x48] sm:$0xff] %v611
  %628 = vst [vmem:[%s5 + $0x50] sm:$0xff] %v612
  %629 = vst [vmem:[%s5 + $0x58] sm:$0xff] %v613
  %630 = vst [vmem:[%s5 + $0x60] sm:$0xff] %v614
  %631 = vst [vmem:[%s5 + $0x68] sm:$0xff] %v615
  %632 = vst [vmem:[%s5 + $0x70] sm:$0xff] %v616
  %633 = vst [vmem:[%s5 + $0x78] sm:$0xff] %v617
  // Predicated region
  $region26: #{gcn_forward.3} parent=0 // pred_check
    _
  $region27: #{gcn_forward.3} parent=0 // pred_check_branch
    %635 = sbr.rel (0) target = $region29
  $region28: #{gcn_forward.3} parent=0 // pred_region
    _
  $region29: #{gcn_forward.3} parent=0 // pred_fallthru
    _
  // Predicated region
  $region30: #{gcn_forward.3} parent=0 // pred_check
    _
  $region31: #{gcn_forward.3} parent=0 // pred_check_branch
    %637 = sbr.rel (0) target = $region33
  $region32: #{gcn_forward.3} parent=0 // pred_region
    _
  $region33: #{gcn_forward.3} parent=0 // pred_fallthru
    _

</llo_original>
